<compile_context>
chip_gen: v6e
topology: v6e:2x2x1
jax: 0.10.0
libtpu: 0.0.40
codegen_flags: <defaults>
</compile_context>

<pallas_src>
import jax
import jax.numpy as jnp
from jax.experimental import pallas as pl
from jax.experimental.pallas import tpu as pltpu


def autopad(k, p=None):
    if p is None:
        p = k // 2 if isinstance(k, int) else [x // 2 for x in k]
    return p


def _round_up(x, m):
    return (x + m - 1) // m * m


def _gemm_bn_silu_kernel(p_ref, w_ref, scale_ref, shift_ref, o_ref):
    """One (batch, row-tile) block.

    p_ref:     (1, TM, KK)   im2col patches (bf16), KK = k*k*C1
    w_ref:     (KK, C2p)     conv weights folded to a 2-D matrix (bf16), C2p = round_up(C2, 128)
    scale_ref: (1, C2p)      folded BN scale  = gamma / sqrt(var + eps)   (f32)
    shift_ref: (1, C2p)      folded BN shift  = beta - mean * scale       (f32)
    o_ref:     (1, TM, C2p)
    """
    # Single MXU contraction with K = k*k*C1 (replaces the old k*k tiny dots).
    acc = jnp.dot(p_ref[0], w_ref[...], preferred_element_type=jnp.float32)
    # Fused BatchNorm (eval mode) + SiLU.  Epilogue stays f32 (v5e has no bf16 VPU/EUP).
    y = acc * scale_ref[...] + shift_ref[...]
    y = y * jax.nn.sigmoid(y)                      # exp/recip go to the (otherwise idle) EUP
    o_ref[0] = y.astype(o_ref.dtype)


def conv_bn_silu(x_nchw, w_oihw, gamma, beta, running_mean, running_var,
                 *, stride=1, padding=None, eps=1e-5, row_tile=256):
    """Conv2d(bias=False) + BatchNorm2d(eval) + SiLU.  x_nchw: (N, C1, H, W) -> (N, C2, Ho, Wo)."""
    n, c1, h, w = x_nchw.shape
    c2, c1_w, k, k2 = w_oihw.shape
    assert c1 == c1_w and k == k2, "groups != 1 not supported"  # TODO(synk): grouped conv (g > 1)
    s = stride
    p = autopad(k, padding)

    h_out = (h + 2 * p - k) // s + 1
    w_out = (w + 2 * p - k) // s + 1
    hw = h_out * w_out
    kk = k * k * c1

    c2p = _round_up(c2, 128)                 # lane-dense output channels (unmasked vst)
    tm = min(row_tile, _round_up(hw, 8))     # sublane-aligned output-row tile
    hw_pad = _round_up(hw, tm)

    # ---- wrapper-side plumbing (plain JAX): layout, padding, im2col, BN folding ----
    x_nhwc = jnp.transpose(x_nchw, (0, 2, 3, 1))                       # NCHW -> NHWC
    x_padded = jnp.pad(x_nhwc, ((0, 0), (p, p), (p, p), (0, 0)))       # (N, Hp, Wp, C1)

    # im2col / space-to-depth: kernel then sees contiguous rows; stride is absorbed here.
    # TODO(synk): for large feature maps, build this inside the kernel via halo'd BlockSpecs
    #             to avoid the k*k HBM expansion of the patch tensor.
    cols = []
    for ky in range(k):
        for kx in range(k):
            cols.append(x_padded[:, ky:ky + (h_out - 1) * s + 1:s,
                                    kx:kx + (w_out - 1) * s + 1:s, :])
    patches = jnp.concatenate(cols, axis=-1).reshape(n, hw, kk)        # (N, HW, k*k*C1)
    patches = jnp.pad(patches, ((0, 0), (0, hw_pad - hw), (0, 0)))
    patches = patches.astype(jnp.bfloat16)                             # bf16 MXU operands

    # OIHW -> (k*k*C1, C2p), same (ky, kx, ci) ordering as the patches above.
    w2d = jnp.transpose(w_oihw, (2, 3, 1, 0)).reshape(kk, c2)
    w2d = jnp.pad(w2d, ((0, 0), (0, c2p - c2))).astype(jnp.bfloat16)

    scale = gamma.astype(jnp.float32) / jnp.sqrt(running_var.astype(jnp.float32) + eps)
    shift = beta.astype(jnp.float32) - running_mean.astype(jnp.float32) * scale
    scale = jnp.pad(scale, (0, c2p - c2)).reshape(1, c2p)
    shift = jnp.pad(shift, (0, c2p - c2)).reshape(1, c2p)

    grid = (n, hw_pad // tm)
    out_itemsize = jnp.dtype(x_nchw.dtype).itemsize
    cost = pl.CostEstimate(
        flops=2 * n * hw * kk * c2,
        transcendentals=n * hw * c2,
        bytes_accessed=patches.size * 2 + w2d.size * 2 + n * hw_pad * c2p * out_itemsize,
    )

    out = pl.pallas_call(
        _gemm_bn_silu_kernel,
        out_shape=jax.ShapeDtypeStruct((n, hw_pad, c2p), x_nchw.dtype),
        grid_spec=pl.GridSpec(
            grid=grid,
            in_specs=[
                pl.BlockSpec((1, tm, kk), lambda b, i: (b, i, 0)),
                pl.BlockSpec((kk, c2p), lambda b, i: (0, 0)),
                pl.BlockSpec((1, c2p), lambda b, i: (0, 0)),
                pl.BlockSpec((1, c2p), lambda b, i: (0, 0)),
            ],
            out_specs=pl.BlockSpec((1, tm, c2p), lambda b, i: (b, i, 0)),
        ),
        compiler_params=pltpu.CompilerParams(
            dimension_semantics=("parallel", "parallel"),
            vmem_limit_bytes=32 * 1024 * 1024,      # explicit budget; tiles stay well under it
        ),
        cost_estimate=cost,
    )(patches, w2d, scale, shift)

    out = out[:, :hw, :c2].reshape(n, h_out, w_out, c2)                # drop row/lane padding
    return jnp.transpose(out, (0, 3, 1, 2))                            # NHWC -> NCHW


if __name__ == "__main__":
    # Conv(c1=4, c2=8, k=3, s=1) on a (2, 4, 16, 16) NCHW input.
    key = jax.random.PRNGKey(0)
    k_x, k_w, k_g, k_b, k_m, k_v = jax.random.split(key, 6)

    N, C1, C2, H, W, K, S = 2, 4, 8, 16, 16, 3, 1

    x = jax.random.normal(k_x, (N, C1, H, W), dtype=jnp.float32)
    w = jax.random.normal(k_w, (C2, C1, K, K), dtype=jnp.float32) * 0.1
    gamma = 1.0 + 0.1 * jax.random.normal(k_g, (C2,), dtype=jnp.float32)
    beta = 0.1 * jax.random.normal(k_b, (C2,), dtype=jnp.float32)
    running_mean = 0.1 * jax.random.normal(k_m, (C2,), dtype=jnp.float32)
    running_var = jnp.abs(jax.random.normal(k_v, (C2,), dtype=jnp.float32)) + 0.5

    out = conv_bn_silu(x, w, gamma, beta, running_mean, running_var, stride=S)
    jax.block_until_ready(out)
    assert out.shape == (N, C2, H, W), out.shape

    # Reference check (same bf16-rounded operands as the kernel feeds the MXU).
    xb = x.astype(jnp.bfloat16).astype(jnp.float32)
    wb = w.astype(jnp.bfloat16).astype(jnp.float32)
    pad = autopad(K)
    ref = jax.lax.conv_general_dilated(
        xb, wb, (S, S), [(pad, pad), (pad, pad)],
        dimension_numbers=("NCHW", "OIHW", "NCHW"),
        preferred_element_type=jnp.float32,
        precision=jax.lax.Precision.HIGHEST)
    r_scale = gamma / jnp.sqrt(running_var + 1e-5)
    r_shift = beta - running_mean * r_scale
    ref = ref * r_scale[None, :, None, None] + r_shift[None, :, None, None]
    ref = ref * jax.nn.sigmoid(ref)
    max_err = float(jnp.max(jnp.abs(out - ref)))
    assert jnp.allclose(out, ref, atol=5e-2, rtol=5e-2), max_err

    print("KERNEL_OK")
</pallas_src>

<mosaic_0001>
module attributes {stable_mosaic.version = 11 : i64} {
  func.func @_gemm_bn_silu_kernel(%arg0: i32, %arg1: i32, %arg2: memref<1x256x36xbf16, #tpu.memory_space<vmem>>, %arg3: memref<36x128xbf16, #tpu.memory_space<vmem>>, %arg4: memref<1x128xf32, #tpu.memory_space<vmem>>, %arg5: memref<1x128xf32, #tpu.memory_space<vmem>>, %arg6: memref<1x256x128xf32, #tpu.memory_space<vmem>>) attributes {dimension_semantics = [#tpu.dimension_semantics<parallel>, #tpu.dimension_semantics<parallel>], iteration_bounds = array<i64: 2, 1>, scalar_prefetch = 0 : i64, scratch_operands = 0 : i64, tpu.core_type = #tpu.core_type<tc>, window_params = [{transform_indices = @transform_0, window_bounds = array<i64: 1, 256, 36>}, {pipeline_mode = #tpu.pipeline_mode<synchronous>, transform_indices = @transform_1, window_bounds = array<i64: 36, 128>}, {pipeline_mode = #tpu.pipeline_mode<synchronous>, transform_indices = @transform_2, window_bounds = array<i64: 1, 128>}, {pipeline_mode = #tpu.pipeline_mode<synchronous>, transform_indices = @transform_3, window_bounds = array<i64: 1, 128>}, {transform_indices = @transform_4, window_bounds = array<i64: 1, 256, 128>}]} {
    %c0 = arith.constant 0 : index
    %c0_0 = arith.constant 0 : index
    %c0_1 = arith.constant 0 : index
    %0 = vector.load %arg2[%c0, %c0_0, %c0_1] : memref<1x256x36xbf16, #tpu.memory_space<vmem>>, vector<1x256x36xbf16>
    %1 = vector.shape_cast %0 : vector<1x256x36xbf16> to vector<256x36xbf16>
    %c0_2 = arith.constant 0 : index
    %c0_3 = arith.constant 0 : index
    %2 = vector.load %arg3[%c0_2, %c0_3] : memref<36x128xbf16, #tpu.memory_space<vmem>>, vector<36x128xbf16>
    %cst = arith.constant dense<0.000000e+00> : vector<256x128xf32>
    %3 = tpu.matmul %1, %2, %cst {dimension_numbers = #tpu.dot_dimension_numbers<[1], [0], [0], [1], [0, 0, 1, 1], [], []>} : vector<256x36xbf16>, vector<36x128xbf16>, vector<256x128xf32> -> vector<256x128xf32>
    %c0_4 = arith.constant 0 : index
    %c0_5 = arith.constant 0 : index
    %4 = vector.load %arg4[%c0_4, %c0_5] : memref<1x128xf32, #tpu.memory_space<vmem>>, vector<1x128xf32>
    %5 = vector.broadcast %4 : vector<1x128xf32> to vector<256x128xf32>
    %6 = arith.mulf %3, %5 : vector<256x128xf32>
    %c0_6 = arith.constant 0 : index
    %c0_7 = arith.constant 0 : index
    %7 = vector.load %arg5[%c0_6, %c0_7] : memref<1x128xf32, #tpu.memory_space<vmem>>, vector<1x128xf32>
    %8 = vector.broadcast %7 : vector<1x128xf32> to vector<256x128xf32>
    %9 = arith.addf %6, %8 : vector<256x128xf32>
    %10 = arith.negf %9 : vector<256x128xf32>
    %11 = math.exp %10 : vector<256x128xf32>
    %cst_8 = arith.constant 1.000000e+00 : f32
    %12 = vector.broadcast %cst_8 : f32 to vector<256x128xf32>
    %13 = arith.addf %12, %11 : vector<256x128xf32>
    %14 = arith.divf %12, %13 : vector<256x128xf32>
    %15 = arith.mulf %9, %14 : vector<256x128xf32>
    %c0_9 = arith.constant 0 : index
    %c0_10 = arith.constant 0 : index
    %c0_11 = arith.constant 0 : index
    %16 = vector.load %arg6[%c0_9, %c0_10, %c0_11] : memref<1x256x128xf32, #tpu.memory_space<vmem>>, vector<1x256x128xf32>
    %17 = vector.shape_cast %16 : vector<1x256x128xf32> to vector<256x128xf32>
    %18 = vector.shape_cast %15 : vector<256x128xf32> to vector<1x256x128xf32>
    tpu.vector_store %arg6[%c0_9, %c0_10, %c0_11], %18 {strides = array<i32>} : memref<1x256x128xf32, #tpu.memory_space<vmem>>, vector<1x256x128xf32>,
    return
  }
  func.func @transform_0(%arg0: i32, %arg1: i32) -> (i32, i32, i32) {
    %c0_i32 = arith.constant 0 : i32
    %c0_i32_0 = arith.constant 0 : i32
    return %arg0, %arg1, %c0_i32 : i32, i32, i32
  }
  func.func @transform_1(%arg0: i32, %arg1: i32) -> (i32, i32) {
    %c0_i32 = arith.constant 0 : i32
    %c0_i32_0 = arith.constant 0 : i32
    %c0_i32_1 = arith.constant 0 : i32
    return %c0_i32, %c0_i32_0 : i32, i32
  }
  func.func @transform_2(%arg0: i32, %arg1: i32) -> (i32, i32) {
    %c0_i32 = arith.constant 0 : i32
    %c0_i32_0 = arith.constant 0 : i32
    %c0_i32_1 = arith.constant 0 : i32
    return %c0_i32, %c0_i32_0 : i32, i32
  }
  func.func @transform_3(%arg0: i32, %arg1: i32) -> (i32, i32) {
    %c0_i32 = arith.constant 0 : i32
    %c0_i32_0 = arith.constant 0 : i32
    %c0_i32_1 = arith.constant 0 : i32
    return %c0_i32, %c0_i32_0 : i32, i32
  }
  func.func @transform_4(%arg0: i32, %arg1: i32) -> (i32, i32, i32) {
    %c0_i32 = arith.constant 0 : i32
    %c0_i32_0 = arith.constant 0 : i32
    return %arg0, %arg1, %c0_i32 : i32, i32, i32
  }
}

</mosaic_0001>

<llo_original>
// kernel: tpu_custom_call.1
$region0: #{tpu_custom_call.1}
  #allocation0 [shape = 'u32[]', space=smem, size = 0x4, offset = 0x4, fixed_abs, tag = 'smem constant byte address 0x4 - core index']
  #allocation1 [shape = 'u32[144,128]{1,0:T(1,128)}', space=vmem, size = 0x12000, scoped, tag = 'internal scratch']
  %s0 = inlined_call_operand.vmem [shape: bf16[2,256,36], index: 0, kind: input, shape index: {}]
  %s1 = inlined_call_operand.vmem [shape: bf16[36,128], index: 1, kind: input, shape index: {}]
  %s2 = inlined_call_operand.vmem [shape: f32[1,128], index: 2, kind: input, shape index: {}]
  %s3 = inlined_call_operand.vmem [shape: f32[1,128], index: 3, kind: input, shape index: {}]
  %s4 = inlined_call_operand.hbm [shape: f32[2,256,128], index: 4, kind: output, shape index: {}]
  %s5 = sld [smem:[#allocation0]]
  $region49: #{tpu_custom_call.1} parent=0
    _
  %s7 = ssub.s32 1, %s5
  %s8 = scalar_select 0, %s7, %s5
  $region1: #{tpu_custom_call.1} parent=0
    #allocation2 [shape = 'u8[262144]{0}', space=vmem, size = 0x40000, scoped, tag = 'output window, operand 0']
    #allocation3 [shape = 's32[2]{0}', space=sflag, size = 0x8, scoped, tag = 'scoped memory for tpu_custom_call.1']
    %9 = vsyncpa [#allocation3], 0
    %s10 = scalar_lea.sflag [#allocation3], 1
    %11 = vsyncpa %s10, 0
    loop: start=0, step=1, limit=4
    $region2: #{tpu_custom_call.1} parent=1 // loop_pre_header
      _
    $region3: #{tpu_custom_call.1} parent=1 // loop_header
      %s13 = sphi 0, %s17
      %p14 = scmp.ge.s32.totalorder %s13, 4
      %s20 = sphi 0, %s32
      %s21 = sphi 0, %s28
      %s22 = sphi 0, %s20
      %s23 = sphi 0, %s21
      %s24 = sphi 0, %s22
      %s25 = sphi 0, %s23
      %s37 = sphi 0, %s39
      %s40 = sphi 0, %s37
      %s41 = sphi 0, %s40
      %s57 = sphi 0, %s41
      %s61 = sphi 0, %s61
      %s63 = sphi 0, %s61
      %s64 = sphi 0, %s63
      %s78 = sphi 0, %s64
      %s82 = sphi 0, %s82
      %s84 = sphi 0, %s82
      %s85 = sphi 0, %s84
      %s99 = sphi 0, %s85
      %s103 = sphi 0, %s103
      %s105 = sphi 0, %s103
      %s106 = sphi 0, %s105
      %s120 = sphi 0, %s106
      %s128 = sphi 0, %s130
      %s131 = sphi 0, %s128
      %s132 = sphi 0, %s131
      %s148 = sphi 0, %s132
    $region4: #{tpu_custom_call.1} parent=1 // loop_header_branch
      %16 = sbr.rel (%p14) target = $region8
    $region5: #{tpu_custom_call.1} parent=1 // loop_body
      %s18 = ssub.s32 %s13, 1
      %s19 = ssub.s32 %s13, 2
      %s26 = sadd.s32 1, %s21
      %p27 = scmp.ge.s32.totalorder %s26, 1
      %s28 = scalar_select %p27, 0, %s26
      %s29 = sadd.s32 1, %s20
      %s30 = scalar_select %p27, %s29, %s20
      %p31 = scmp.ge.s32.totalorder %s30, 2
      %s32 = scalar_select %p31, 0, %s30
      %s33 = ssub.s32 %s20, %s32
      %s34 = ssub.s32 %s21, %s28
      %s35 = sor.u32 %s33, %s34
      %p36 = scmp.eq.s32.totalorder %s35, 0
      %s38 = sadd.s32 %s37, 1
      %s39 = scalar_select %p36, %s37, %s38
      %p42 = pneg %p36
      %p43 = scmp.eq.s32.totalorder %s13, 1
      %p44 = por %p42, %p43
      %p45 = scmp.ne.s32.totalorder %s37, %s40
      %p46 = scmp.eq.s32.totalorder %s13, 0
      %p47 = por %p45, %p46
      %p48 = scmp.ne.s32.totalorder %s37, %s40
      %p49 = scmp.eq.s32.totalorder %s18, 1
      %p50 = por %p48, %p49
      %p51 = scmp.ne.s32.totalorder %s40, %s41
      %p52 = scmp.eq.s32.totalorder %s18, 0
      %p53 = por %p51, %p52
      %p54 = scmp.ne.s32.totalorder %s40, %s41
      %p55 = scmp.eq.s32.totalorder %s19, 1
      %p56 = por %p54, %p55
      %p58 = scmp.ne.s32.totalorder %s41, %s57
      %p59 = scmp.eq.s32.totalorder %s19, 0
      %p60 = por %p58, %p59
      %s62 = sadd.s32 %s61, 1
      %p65 = scmp.eq.s32.totalorder %s13, 1
      %p66 = scmp.ne.s32.totalorder %s61, %s63
      %p67 = scmp.eq.s32.totalorder %s13, 0
      %p68 = por %p66, %p67
      %p69 = scmp.ne.s32.totalorder %s61, %s63
      %p70 = scmp.eq.s32.totalorder %s18, 1
      %p71 = por %p69, %p70
      %p72 = scmp.ne.s32.totalorder %s63, %s64
      %p73 = scmp.eq.s32.totalorder %s18, 0
      %p74 = por %p72, %p73
      %p75 = scmp.ne.s32.totalorder %s63, %s64
      %p76 = scmp.eq.s32.totalorder %s19, 1
      %p77 = por %p75, %p76
      %p79 = scmp.ne.s32.totalorder %s64, %s78
      %p80 = scmp.eq.s32.totalorder %s19, 0
      %p81 = por %p79, %p80
      %s83 = sadd.s32 %s82, 1
      %p86 = scmp.eq.s32.totalorder %s13, 1
      %p87 = scmp.ne.s32.totalorder %s82, %s84
      %p88 = scmp.eq.s32.totalorder %s13, 0
      %p89 = por %p87, %p88
      %p90 = scmp.ne.s32.totalorder %s82, %s84
      %p91 = scmp.eq.s32.totalorder %s18, 1
      %p92 = por %p90, %p91
      %p93 = scmp.ne.s32.totalorder %s84, %s85
      %p94 = scmp.eq.s32.totalorder %s18, 0
      %p95 = por %p93, %p94
      %p96 = scmp.ne.s32.totalorder %s84, %s85
      %p97 = scmp.eq.s32.totalorder %s19, 1
      %p98 = por %p96, %p97
      %p100 = scmp.ne.s32.totalorder %s85, %s99
      %p101 = scmp.eq.s32.totalorder %s19, 0
      %p102 = por %p100, %p101
      %s104 = sadd.s32 %s103, 1
      %p107 = scmp.eq.s32.totalorder %s13, 1
      %p108 = scmp.ne.s32.totalorder %s103, %s105
      %p109 = scmp.eq.s32.totalorder %s13, 0
      %p110 = por %p108, %p109
      %p111 = scmp.ne.s32.totalorder %s103, %s105
      %p112 = scmp.eq.s32.totalorder %s18, 1
      %p113 = por %p111, %p112
      %p114 = scmp.ne.s32.totalorder %s105, %s106
      %p115 = scmp.eq.s32.totalorder %s18, 0
      %p116 = por %p114, %p115
      %p117 = scmp.ne.s32.totalorder %s105, %s106
      %p118 = scmp.eq.s32.totalorder %s19, 1
      %p119 = por %p117, %p118
      %p121 = scmp.ne.s32.totalorder %s106, %s120
      %p122 = scmp.eq.s32.totalorder %s19, 0
      %p123 = por %p121, %p122
      %s124 = ssub.s32 %s20, %s32
      %s125 = ssub.s32 %s21, %s28
      %s126 = sor.u32 %s124, %s125
      %p127 = scmp.eq.s32.totalorder %s126, 0
      %s129 = sadd.s32 %s128, 1
      %s130 = scalar_select %p127, %s128, %s129
      %p133 = pneg %p127
      %p134 = scmp.eq.s32.totalorder %s13, 1
      %p135 = por %p133, %p134
      %p136 = scmp.ne.s32.totalorder %s128, %s131
      %p137 = scmp.eq.s32.totalorder %s13, 0
      %p138 = por %p136, %p137
      %p139 = scmp.ne.s32.totalorder %s128, %s131
      %p140 = scmp.eq.s32.totalorder %s18, 1
      %p141 = por %p139, %p140
      %p142 = scmp.ne.s32.totalorder %s131, %s132
      %p143 = scmp.eq.s32.totalorder %s18, 0
      %p144 = por %p142, %p143
      %p145 = scmp.ne.s32.totalorder %s131, %s132
      %p146 = scmp.eq.s32.totalorder %s19, 1
      %p147 = por %p145, %p146
      %p149 = scmp.ne.s32.totalorder %s132, %s148
      %p150 = scmp.eq.s32.totalorder %s19, 0
      %p151 = por %p149, %p150
      %p152 = scmp.le.s32.totalorder 1, %s13
      %p153 = scmp.lt.s32.totalorder %s13, 3
      %p154 = pnand %p152, %p153
      %p155 = pneg %p154
      // Predicated region
      $region9: #{tpu_custom_call.1} parent=5 // pred_check
        _
      $region10: #{tpu_custom_call.1} parent=5 // pred_check_branch
        %157 = sbr.rel (%p154) target = $region12
      $region11: #{tpu_custom_call.1} parent=5 // pred_region
        %s158 = ssub.s32 %s13, 1
        // Predicated region
        $region13: #{tpu_custom_call.1} parent=11 // pred_check
          %p159 = pneg %p74
        $region14: #{tpu_custom_call.1} parent=11 // pred_check_branch
          %161 = sbr.rel (%p159) target = $region16
        $region15: #{tpu_custom_call.1} parent=11 // pred_region
          _
        $region16: #{tpu_custom_call.1} parent=11 // pred_fallthru
          _
        // Predicated region
        $region17: #{tpu_custom_call.1} parent=11 // pred_check
          %p162 = pneg %p95
        $region18: #{tpu_custom_call.1} parent=11 // pred_check_branch
          %164 = sbr.rel (%p162) target = $region20
        $region19: #{tpu_custom_call.1} parent=11 // pred_region
          _
        $region20: #{tpu_custom_call.1} parent=11 // pred_fallthru
          _
        // Predicated region
        $region21: #{tpu_custom_call.1} parent=11 // pred_check
          %p165 = pneg %p116
        $region22: #{tpu_custom_call.1} parent=11 // pred_check_branch
          %167 = sbr.rel (%p165) target = $region24
        $region23: #{tpu_custom_call.1} parent=11 // pred_region
          _
        $region24: #{tpu_custom_call.1} parent=11 // pred_fallthru
          _
      $region12: #{tpu_custom_call.1} parent=5 // pred_fallthru
        _
      %p168 = scmp.lt.s32.totalorder %s13, 2
      // Predicated region
      $region25: #{tpu_custom_call.1} parent=5 // pred_check
        %p169 = pneg %p168
      $region26: #{tpu_custom_call.1} parent=5 // pred_check_branch
        %171 = sbr.rel (%p169) target = $region28
      $region27: #{tpu_custom_call.1} parent=5 // pred_region
        // Predicated region
        $region29: #{tpu_custom_call.1} parent=27 // pred_check
          %p172 = pneg %p47
        $region30: #{tpu_custom_call.1} parent=27 // pred_check_branch
          %174 = sbr.rel (%p172) target = $region32
        $region31: #{tpu_custom_call.1} parent=27 // pred_region
          %s175 = smul.u32 32, %s21
          %p176 = scmp.lt.s32.totalorder %s20, 1
          %s177 = scalar_select %p176, %s20, 1
          %p178 = scmp.lt.s32.totalorder %s175, 31
          %s179 = scalar_select %p178, %s175, 31
          %s180 = smul.addr %s177, 32
          %s181 = sadd.s32 %s179, %s180
          %s182 = smul.addr %s181, 4
          %s183 = scalar_lea.vmem %s0, %s182
          %s184 = smul.u32 32, %s21
        $region32: #{tpu_custom_call.1} parent=27 // pred_fallthru
          _
      $region28: #{tpu_custom_call.1} parent=5 // pred_fallthru
        _
      %p185 = scmp.le.s32.totalorder 1, %s13
      %p186 = scmp.lt.s32.totalorder %s13, 3
      %p187 = pnand %p185, %p186
      %p188 = pneg %p187
      // Predicated region
      $region33: #{tpu_custom_call.1} parent=5 // pred_check
        _
      $region34: #{tpu_custom_call.1} parent=5 // pred_check_branch
        %190 = sbr.rel (%p187) target = $region36
      $region35: #{tpu_custom_call.1} parent=5 // pred_region
        %s191 = ssub.s32 %s13, 1
        %s192 = smul.u32 32, %s23
        %p193 = scmp.lt.s32.totalorder %s22, 1
        %s194 = scalar_select %p193, %s22, 1
        %p195 = scmp.lt.s32.totalorder %s192, 31
        %s196 = scalar_select %p195, %s192, 31
        %s197 = smul.addr %s194, 32
        %s198 = sadd.s32 %s196, %s197
        %s199 = smul.addr %s198, 4
        %s200 = scalar_lea.vmem %s0, %s199
        %p201 = pneg %p53
        %p202 = pneg %p50
        %p203 = pneg %p74
        %p204 = pneg %p71
        %p205 = pneg %p95
        %p206 = pneg %p92
        %p207 = pneg %p116
        %p208 = pneg %p113
        %p209 = pneg %p144
        %p210 = pneg %p141
        %s211 = sand.u32 %s131, 1
        %s212 = scalar_lea.sflag [#allocation3], %s211
        %s213 = sand.u32 %s131, 1
        %s214 = smul.addr %s213, 256
        %s215 = scalar_lea.vmem [#allocation2], %s214
        %s216 = smul.u32 32, %s23
        %p217 = scmp.lt.s32.totalorder %s22, 1
        %s218 = scalar_select %p217, %s22, 1
        %p219 = scmp.lt.s32.totalorder %s216, 31
        %s220 = scalar_select %p219, %s216, 31
        %s221 = smul.addr %s218, 32
        %s222 = sadd.s32 %s220, %s221
        %s223 = smul.addr %s222, 4
        %s224 = scalar_lea.vmem %s0, %s223
        %s225 = smul.u32 32, %s23
        %s226 = smul.u32 32, %s23
        %v228 = vld [vmem:[%s224] sm:$0xf]
        %v229 = vld [vmem:[%s224 + $0x4] sm:$0xf]
        %v230 = vld [vmem:[%s224 + $0x8] sm:$0xf]
        %v231 = vld [vmem:[%s224 + $0xc] sm:$0xf]
        %v232 = vld [vmem:[%s224 + $0x10] sm:$0xf]
        %v233 = vld [vmem:[%s224 + $0x14] sm:$0xf]
        %v234 = vld [vmem:[%s224 + $0x18] sm:$0xf]
        %v235 = vld [vmem:[%s224 + $0x1c] sm:$0xf]
        %v236 = vld [vmem:[%s224 + $0x20] sm:$0xf]
        %v237 = vld [vmem:[%s224 + $0x24] sm:$0xf]
        %v238 = vld [vmem:[%s224 + $0x28] sm:$0xf]
        %v239 = vld [vmem:[%s224 + $0x2c] sm:$0xf]
        %v240 = vld [vmem:[%s224 + $0x30] sm:$0xf]
        %v241 = vld [vmem:[%s224 + $0x34] sm:$0xf]
        %v242 = vld [vmem:[%s224 + $0x38] sm:$0xf]
        %v243 = vld [vmem:[%s224 + $0x3c] sm:$0xf]
        %v244 = vld [vmem:[%s224 + $0x40] sm:$0xf]
        %v245 = vld [vmem:[%s224 + $0x44] sm:$0xf]
        %v246 = vld [vmem:[%s224 + $0x48] sm:$0xf]
        %v247 = vld [vmem:[%s224 + $0x4c] sm:$0xf]
        %v248 = vld [vmem:[%s224 + $0x50] sm:$0xf]
        %v249 = vld [vmem:[%s224 + $0x54] sm:$0xf]
        %v250 = vld [vmem:[%s224 + $0x58] sm:$0xf]
        %v251 = vld [vmem:[%s224 + $0x5c] sm:$0xf]
        %v252 = vld [vmem:[%s224 + $0x60] sm:$0xf]
        %v253 = vld [vmem:[%s224 + $0x64] sm:$0xf]
        %v254 = vld [vmem:[%s224 + $0x68] sm:$0xf]
        %v255 = vld [vmem:[%s224 + $0x6c] sm:$0xf]
        %v256 = vld [vmem:[%s224 + $0x70] sm:$0xf]
        %v257 = vld [vmem:[%s224 + $0x74] sm:$0xf]
        %v258 = vld [vmem:[%s224 + $0x78] sm:$0xf]
        %v259 = vld [vmem:[%s224 + $0x7c] sm:$0xf]
        %v260 = vld [vmem:[%s1] sm:$0xf]
        %v261 = vld [vmem:[%s1 + $0x4] sm:$0xf]
        %v262 = vld [vmem:[%s1 + $0x8] sm:$0xf]
        %v263 = vld [vmem:[%s1 + $0xc] sm:$0xf]
        %v264 = vld [vmem:[%s1 + $0x10] sm:$0x3]
        %v297 = vunpack.c.l.b16 %v228
        %v298 = vunpack.c.l.b16 %v229
        %v299 = vunpack.c.l.b16 %v230
        %v300 = vunpack.c.l.b16 %v231
        %v301 = vunpack.c.l.b16 %v232
        %v302 = vunpack.c.l.b16 %v233
        %v303 = vunpack.c.l.b16 %v234
        %v304 = vunpack.c.l.b16 %v235
        %v305 = vunpack.c.l.b16 %v236
        %v306 = vunpack.c.l.b16 %v237
        %v307 = vunpack.c.l.b16 %v238
        %v308 = vunpack.c.l.b16 %v239
        %v309 = vunpack.c.l.b16 %v240
        %v310 = vunpack.c.l.b16 %v241
        %v311 = vunpack.c.l.b16 %v242
        %v312 = vunpack.c.l.b16 %v243
        %v313 = vunpack.c.l.b16 %v244
        %v314 = vunpack.c.l.b16 %v245
        %v315 = vunpack.c.l.b16 %v246
        %v316 = vunpack.c.l.b16 %v247
        %v317 = vunpack.c.l.b16 %v248
        %v318 = vunpack.c.l.b16 %v249
        %v319 = vunpack.c.l.b16 %v250
        %v320 = vunpack.c.l.b16 %v251
        %v321 = vunpack.c.l.b16 %v252
        %v322 = vunpack.c.l.b16 %v253
        %v323 = vunpack.c.l.b16 %v254
        %v324 = vunpack.c.l.b16 %v255
        %v325 = vunpack.c.l.b16 %v256
        %v326 = vunpack.c.l.b16 %v257
        %v327 = vunpack.c.l.b16 %v258
        %v328 = vunpack.c.l.b16 %v259
        %v329 = vpack.c.b16 %v298, %v297
        %v330 = vpack.c.b16 %v300, %v299
        %v331 = vpack.c.b16 %v302, %v301
        %v332 = vpack.c.b16 %v304, %v303
        %v333 = vpack.c.b16 %v306, %v305
        %v334 = vpack.c.b16 %v308, %v307
        %v335 = vpack.c.b16 %v310, %v309
        %v336 = vpack.c.b16 %v312, %v311
        %v337 = vpack.c.b16 %v314, %v313
        %v338 = vpack.c.b16 %v316, %v315
        %v339 = vpack.c.b16 %v318, %v317
        %v340 = vpack.c.b16 %v320, %v319
        %v341 = vpack.c.b16 %v322, %v321
        %v342 = vpack.c.b16 %v324, %v323
        %v343 = vpack.c.b16 %v326, %v325
        %v344 = vpack.c.b16 %v328, %v327
        %v350 = vunpack.c.l.b16 %v260
        %v351 = vunpack.c.l.b16 %v261
        %v352 = vunpack.c.l.b16 %v262
        %v353 = vunpack.c.l.b16 %v263
        %v354 = vunpack.c.l.b16 %v264
        %v355 = vpack.c.b16 %v351, %v350
        %v356 = vpack.c.b16 %v353, %v352
        %v357 = vpack.c.b16 %v354, %v354
        %vm360 = vcmask 293888
        %v362 = vsel %vm360, %v329, 0
        %v365 = vsel %vm360, %v330, 0
        %v368 = vsel %vm360, %v331, 0
        %v371 = vsel %vm360, %v332, 0
        %v374 = vsel %vm360, %v333, 0
        %v377 = vsel %vm360, %v334, 0
        %v380 = vsel %vm360, %v335, 0
        %v383 = vsel %vm360, %v336, 0
        %v386 = vsel %vm360, %v337, 0
        %v389 = vsel %vm360, %v338, 0
        %v392 = vsel %vm360, %v339, 0
        %v395 = vsel %vm360, %v340, 0
        %v398 = vsel %vm360, %v341, 0
        %v401 = vsel %vm360, %v342, 0
        %v404 = vsel %vm360, %v343, 0
        %v407 = vsel %vm360, %v344, 0
        %vm409 = vcmask 1041408
        %v411 = vsel %vm409, %v357, 0
        %413 = vmatprep.subr.bf16.mxu0 0
        %414 = vmatpush1.bf16.msra.mxu0 0
        %415 = vmatprep.subr.bf16.mxu0 0
        %416 = vmatpush1.bf16.msra.mxu0 0
        %417 = vmatprep.subr.bf16.mxu0 0
        %418 = vmatpush1.bf16.msra.mxu0 0
        %419 = vmatprep.subr.bf16.mxu0 0
        %420 = vmatpush1.bf16.msra.mxu0 0
        %421 = vmatprep.subr.bf16.mxu0 0
        %422 = vmatpush1.bf16.msra.mxu0 0
        %423 = vmatprep.subr.bf16.mxu0 0
        %424 = vmatpush1.bf16.msra.mxu0 %v411
        %425 = vmatprep.subr.bf16.mxu0 0
        %426 = vmatpush1.bf16.msra.mxu0 %v356
        %427 = vmatprep.subr.bf16.mxu0 0
        %428 = vmatpush1.bf16.msra.mxu0 %v355
        %429 = vmatprep.subr.bf16.mxu0 0
        %430 = vmatpush2.bf16.msra.mxu0 0
        %431 = vmatprep.subr.bf16.mxu0 0
        %432 = vmatpush2.bf16.msra.mxu0 0
        %433 = vmatprep.subr.bf16.mxu0 0
        %434 = vmatpush2.bf16.msra.mxu0 0
        %435 = vmatprep.subr.bf16.mxu0 0
        %436 = vmatpush2.bf16.msra.mxu0 0
        %437 = vmatprep.subr.bf16.mxu0 0
        %438 = vmatpush2.bf16.msra.mxu0 0
        %439 = vmatprep.subr.bf16.mxu0 0
        %440 = vmatpush2.bf16.msra.mxu0 0
        %441 = vmatprep.subr.bf16.mxu0 0
        %442 = vmatpush2.bf16.msra.mxu0 0
        %443 = vmatprep.subr.bf16.mxu0 0
        %444 = vmatpush2.bf16.msra.mxu0 0
        %445 = vmatprep.mubr.bf16.mxu0 0
        %446 = vmatmul.mubr.bf16.gmra.mxu0 %v362
        %v447 = vpop.f32.mrf.mxu0
        %v448 = vadd.f32 0.0, %v447
        %v449 = vpop.f32.mrf.mxu0
        %v450 = vpop.f32.mrf.mxu0
        %v451 = vadd.f32 0.0, %v450
        %v452 = vpop.f32.mrf.mxu0
        %453 = vmatprep.mubr.bf16.mxu0 0
        %454 = vmatmul.mubr.bf16.gmra.mxu0 %v365
        %v455 = vpop.f32.mrf.mxu0
        %v456 = vadd.f32 0.0, %v455
        %v457 = vpop.f32.mrf.mxu0
        %v458 = vpop.f32.mrf.mxu0
        %v459 = vadd.f32 0.0, %v458
        %v460 = vpop.f32.mrf.mxu0
        %461 = vmatprep.mubr.bf16.mxu0 0
        %462 = vmatmul.mubr.bf16.gmra.mxu0 %v368
        %v463 = vpop.f32.mrf.mxu0
        %v464 = vadd.f32 0.0, %v463
        %v465 = vpop.f32.mrf.mxu0
        %v466 = vpop.f32.mrf.mxu0
        %v467 = vadd.f32 0.0, %v466
        %v468 = vpop.f32.mrf.mxu0
        %469 = vmatprep.mubr.bf16.mxu0 0
        %470 = vmatmul.mubr.bf16.gmra.mxu0 %v371
        %v471 = vpop.f32.mrf.mxu0
        %v472 = vadd.f32 0.0, %v471
        %v473 = vpop.f32.mrf.mxu0
        %v474 = vpop.f32.mrf.mxu0
        %v475 = vadd.f32 0.0, %v474
        %v476 = vpop.f32.mrf.mxu0
        %477 = vmatprep.mubr.bf16.mxu0 0
        %478 = vmatmul.mubr.bf16.gmra.mxu0 %v374
        %v479 = vpop.f32.mrf.mxu0
        %v480 = vadd.f32 0.0, %v479
        %v481 = vpop.f32.mrf.mxu0
        %v482 = vpop.f32.mrf.mxu0
        %v483 = vadd.f32 0.0, %v482
        %v484 = vpop.f32.mrf.mxu0
        %485 = vmatprep.mubr.bf16.mxu0 0
        %486 = vmatmul.mubr.bf16.gmra.mxu0 %v377
        %v487 = vpop.f32.mrf.mxu0
        %v488 = vadd.f32 0.0, %v487
        %v489 = vpop.f32.mrf.mxu0
        %v490 = vpop.f32.mrf.mxu0
        %v491 = vadd.f32 0.0, %v490
        %v492 = vpop.f32.mrf.mxu0
        %493 = vmatprep.mubr.bf16.mxu0 0
        %494 = vmatmul.mubr.bf16.gmra.mxu0 %v380
        %v495 = vpop.f32.mrf.mxu0
        %v496 = vadd.f32 0.0, %v495
        %v497 = vpop.f32.mrf.mxu0
        %v498 = vpop.f32.mrf.mxu0
        %v499 = vadd.f32 0.0, %v498
        %v500 = vpop.f32.mrf.mxu0
        %501 = vmatprep.mubr.bf16.mxu0 0
        %502 = vmatmul.mubr.bf16.gmra.mxu0 %v383
        %v503 = vpop.f32.mrf.mxu0
        %v504 = vadd.f32 0.0, %v503
        %v505 = vpop.f32.mrf.mxu0
        %v506 = vpop.f32.mrf.mxu0
        %v507 = vadd.f32 0.0, %v506
        %v508 = vpop.f32.mrf.mxu0
        %509 = vmatprep.mubr.bf16.mxu0 0
        %510 = vmatmul.mubr.bf16.gmra.mxu0 %v386
        %v511 = vpop.f32.mrf.mxu0
        %v512 = vadd.f32 0.0, %v511
        %v513 = vpop.f32.mrf.mxu0
        %v514 = vpop.f32.mrf.mxu0
        %v515 = vadd.f32 0.0, %v514
        %v516 = vpop.f32.mrf.mxu0
        %517 = vmatprep.mubr.bf16.mxu0 0
        %518 = vmatmul.mubr.bf16.gmra.mxu0 %v389
        %v519 = vpop.f32.mrf.mxu0
        %v520 = vadd.f32 0.0, %v519
        %v521 = vpop.f32.mrf.mxu0
        %v522 = vpop.f32.mrf.mxu0
        %v523 = vadd.f32 0.0, %v522
        %v524 = vpop.f32.mrf.mxu0
        %525 = vmatprep.mubr.bf16.mxu0 0
        %526 = vmatmul.mubr.bf16.gmra.mxu0 %v392
        %v527 = vpop.f32.mrf.mxu0
        %v528 = vadd.f32 0.0, %v527
        %v529 = vpop.f32.mrf.mxu0
        %v530 = vpop.f32.mrf.mxu0
        %v531 = vadd.f32 0.0, %v530
        %v532 = vpop.f32.mrf.mxu0
        %533 = vmatprep.mubr.bf16.mxu0 0
        %534 = vmatmul.mubr.bf16.gmra.mxu0 %v395
        %v535 = vpop.f32.mrf.mxu0
        %v536 = vadd.f32 0.0, %v535
        %v537 = vpop.f32.mrf.mxu0
        %v538 = vpop.f32.mrf.mxu0
        %v539 = vadd.f32 0.0, %v538
        %v540 = vpop.f32.mrf.mxu0
        %541 = vmatprep.mubr.bf16.mxu0 0
        %542 = vmatmul.mubr.bf16.gmra.mxu0 %v398
        %v543 = vpop.f32.mrf.mxu0
        %v544 = vadd.f32 0.0, %v543
        %v545 = vpop.f32.mrf.mxu0
        %v546 = vpop.f32.mrf.mxu0
        %v547 = vadd.f32 0.0, %v546
        %v548 = vpop.f32.mrf.mxu0
        %549 = vmatprep.mubr.bf16.mxu0 0
        %550 = vmatmul.mubr.bf16.gmra.mxu0 %v401
        %v551 = vpop.f32.mrf.mxu0
        %v552 = vadd.f32 0.0, %v551
        %v553 = vpop.f32.mrf.mxu0
        %v554 = vpop.f32.mrf.mxu0
        %v555 = vadd.f32 0.0, %v554
        %v556 = vpop.f32.mrf.mxu0
        %557 = vmatprep.mubr.bf16.mxu0 0
        %558 = vmatmul.mubr.bf16.gmra.mxu0 %v404
        %v559 = vpop.f32.mrf.mxu0
        %v560 = vadd.f32 0.0, %v559
        %v561 = vpop.f32.mrf.mxu0
        %v562 = vpop.f32.mrf.mxu0
        %v563 = vadd.f32 0.0, %v562
        %v564 = vpop.f32.mrf.mxu0
        %565 = vmatprep.mubr.bf16.mxu0 0
        %566 = vmatmul.mubr.bf16.gmra.mxu0 %v407
        %v567 = vpop.f32.mrf.mxu0
        %v568 = vadd.f32 0.0, %v567
        %v569 = vpop.f32.mrf.mxu0
        %v570 = vpop.f32.mrf.mxu0
        %v571 = vadd.f32 0.0, %v570
        %v572 = vpop.f32.mrf.mxu0
        %573 = vdwg.mxu0
        %v574 = vld [vmem:[%s2] sm:$0x1]
        %v576 = vlaneseq
        %v577 = vshrl.u32 %v576, 7
        %v578 = vsub.s32 0, %v577
        %v579 = vrot.slane %v574, %v578
        %v581 = vmul.f32 %v448, %v579
        %v582 = vmul.f32 %v451, %v579
        %v583 = vmul.f32 %v456, %v579
        %v584 = vmul.f32 %v459, %v579
        %v585 = vmul.f32 %v464, %v579
        %v586 = vmul.f32 %v467, %v579
        %v587 = vmul.f32 %v472, %v579
        %v588 = vmul.f32 %v475, %v579
        %v589 = vmul.f32 %v480, %v579
        %v590 = vmul.f32 %v483, %v579
        %v591 = vmul.f32 %v488, %v579
        %v592 = vmul.f32 %v491, %v579
        %v593 = vmul.f32 %v496, %v579
        %v594 = vmul.f32 %v499, %v579
        %v595 = vmul.f32 %v504, %v579
        %v596 = vmul.f32 %v507, %v579
        %v597 = vmul.f32 %v512, %v579
        %v598 = vmul.f32 %v515, %v579
        %v599 = vmul.f32 %v520, %v579
        %v600 = vmul.f32 %v523, %v579
        %v601 = vmul.f32 %v528, %v579
        %v602 = vmul.f32 %v531, %v579
        %v603 = vmul.f32 %v536, %v579
        %v604 = vmul.f32 %v539, %v579
        %v605 = vmul.f32 %v544, %v579
        %v606 = vmul.f32 %v547, %v579
        %v607 = vmul.f32 %v552, %v579
        %v608 = vmul.f32 %v555, %v579
        %v609 = vmul.f32 %v560, %v579
        %v610 = vmul.f32 %v563, %v579
        %v611 = vmul.f32 %v568, %v579
        %v612 = vmul.f32 %v571, %v579
        %v613 = vld [vmem:[%s3] sm:$0x1]
        %v615 = vlaneseq
        %v616 = vshrl.u32 %v615, 7
        %v617 = vsub.s32 0, %v616
        %v618 = vrot.slane %v613, %v617
        %v620 = vadd.f32 %v581, %v618
        %v621 = vadd.f32 %v582, %v618
        %v622 = vadd.f32 %v583, %v618
        %v623 = vadd.f32 %v584, %v618
        %v624 = vadd.f32 %v585, %v618
        %v625 = vadd.f32 %v586, %v618
        %v626 = vadd.f32 %v587, %v618
        %v627 = vadd.f32 %v588, %v618
        %v628 = vadd.f32 %v589, %v618
        %v629 = vadd.f32 %v590, %v618
        %v630 = vadd.f32 %v591, %v618
        %v631 = vadd.f32 %v592, %v618
        %v632 = vadd.f32 %v593, %v618
        %v633 = vadd.f32 %v594, %v618
        %v634 = vadd.f32 %v595, %v618
        %v635 = vadd.f32 %v596, %v618
        %v636 = vadd.f32 %v597, %v618
        %v637 = vadd.f32 %v598, %v618
        %v638 = vadd.f32 %v599, %v618
        %v639 = vadd.f32 %v600, %v618
        %v640 = vadd.f32 %v601, %v618
        %v641 = vadd.f32 %v602, %v618
        %v642 = vadd.f32 %v603, %v618
        %v643 = vadd.f32 %v604, %v618
        %v644 = vadd.f32 %v605, %v618
        %v645 = vadd.f32 %v606, %v618
        %v646 = vadd.f32 %v607, %v618
        %v647 = vadd.f32 %v608, %v618
        %v648 = vadd.f32 %v609, %v618
        %v649 = vadd.f32 %v610, %v618
        %v650 = vadd.f32 %v611, %v618
        %v651 = vadd.f32 %v612, %v618
        %v652 = vxor.u32 %v620, 2147483648
        %v653 = vxor.u32 %v621, 2147483648
        %v654 = vxor.u32 %v622, 2147483648
        %v655 = vxor.u32 %v623, 2147483648
        %v656 = vxor.u32 %v624, 2147483648
        %v657 = vxor.u32 %v625, 2147483648
        %v658 = vxor.u32 %v626, 2147483648
        %v659 = vxor.u32 %v627, 2147483648
        %v660 = vxor.u32 %v628, 2147483648
        %v661 = vxor.u32 %v629, 2147483648
        %v662 = vxor.u32 %v630, 2147483648
        %v663 = vxor.u32 %v631, 2147483648
        %v664 = vxor.u32 %v632, 2147483648
        %v665 = vxor.u32 %v633, 2147483648
        %v666 = vxor.u32 %v634, 2147483648
        %v667 = vxor.u32 %v635, 2147483648
        %v668 = vxor.u32 %v636, 2147483648
        %v669 = vxor.u32 %v637, 2147483648
        %v670 = vxor.u32 %v638, 2147483648
        %v671 = vxor.u32 %v639, 2147483648
        %v672 = vxor.u32 %v640, 2147483648
        %v673 = vxor.u32 %v641, 2147483648
        %v674 = vxor.u32 %v642, 2147483648
        %v675 = vxor.u32 %v643, 2147483648
        %v676 = vxor.u32 %v644, 2147483648
        %v677 = vxor.u32 %v645, 2147483648
        %v678 = vxor.u32 %v646, 2147483648
        %v679 = vxor.u32 %v647, 2147483648
        %v680 = vxor.u32 %v648, 2147483648
        %v681 = vxor.u32 %v649, 2147483648
        %v682 = vxor.u32 %v650, 2147483648
        %v683 = vxor.u32 %v651, 2147483648
        %v684 = vmul.f32 %v652, 1.442695
        %v685 = vpow.pop %v684
        %v686 = vmul.f32 %v653, 1.442695
        %v687 = vpow.pop %v686
        %v688 = vmul.f32 %v654, 1.442695
        %v689 = vpow.pop %v688
        %v690 = vmul.f32 %v655, 1.442695
        %v691 = vpow.pop %v690
        %v692 = vmul.f32 %v656, 1.442695
        %v693 = vpow.pop %v692
        %v694 = vmul.f32 %v657, 1.442695
        %v695 = vpow.pop %v694
        %v696 = vmul.f32 %v658, 1.442695
        %v697 = vpow.pop %v696
        %v698 = vmul.f32 %v659, 1.442695
        %v699 = vpow.pop %v698
        %v700 = vmul.f32 %v660, 1.442695
        %v701 = vpow.pop %v700
        %v702 = vmul.f32 %v661, 1.442695
        %v703 = vpow.pop %v702
        %v704 = vmul.f32 %v662, 1.442695
        %v705 = vpow.pop %v704
        %v706 = vmul.f32 %v663, 1.442695
        %v707 = vpow.pop %v706
        %v708 = vmul.f32 %v664, 1.442695
        %v709 = vpow.pop %v708
        %v710 = vmul.f32 %v665, 1.442695
        %v711 = vpow.pop %v710
        %v712 = vmul.f32 %v666, 1.442695
        %v713 = vpow.pop %v712
        %v714 = vmul.f32 %v667, 1.442695
        %v715 = vpow.pop %v714
        %v716 = vmul.f32 %v668, 1.442695
        %v717 = vpow.pop %v716
        %v718 = vmul.f32 %v669, 1.442695
        %v719 = vpow.pop %v718
        %v720 = vmul.f32 %v670, 1.442695
        %v721 = vpow.pop %v720
        %v722 = vmul.f32 %v671, 1.442695
        %v723 = vpow.pop %v722
        %v724 = vmul.f32 %v672, 1.442695
        %v725 = vpow.pop %v724
        %v726 = vmul.f32 %v673, 1.442695
        %v727 = vpow.pop %v726
        %v728 = vmul.f32 %v674, 1.442695
        %v729 = vpow.pop %v728
        %v730 = vmul.f32 %v675, 1.442695
        %v731 = vpow.pop %v730
        %v732 = vmul.f32 %v676, 1.442695
        %v733 = vpow.pop %v732
        %v734 = vmul.f32 %v677, 1.442695
        %v735 = vpow.pop %v734
        %v736 = vmul.f32 %v678, 1.442695
        %v737 = vpow.pop %v736
        %v738 = vmul.f32 %v679, 1.442695
        %v739 = vpow.pop %v738
        %v740 = vmul.f32 %v680, 1.442695
        %v741 = vpow.pop %v740
        %v742 = vmul.f32 %v681, 1.442695
        %v743 = vpow.pop %v742
        %v744 = vmul.f32 %v682, 1.442695
        %v745 = vpow.pop %v744
        %v746 = vmul.f32 %v683, 1.442695
        %v747 = vpow.pop %v746
        %v748 = vadd.f32 %v685, 1.0
        %v749 = vadd.f32 %v687, 1.0
        %v750 = vadd.f32 %v689, 1.0
        %v751 = vadd.f32 %v691, 1.0
        %v752 = vadd.f32 %v693, 1.0
        %v753 = vadd.f32 %v695, 1.0
        %v754 = vadd.f32 %v697, 1.0
        %v755 = vadd.f32 %v699, 1.0
        %v756 = vadd.f32 %v701, 1.0
        %v757 = vadd.f32 %v703, 1.0
        %v758 = vadd.f32 %v705, 1.0
        %v759 = vadd.f32 %v707, 1.0
        %v760 = vadd.f32 %v709, 1.0
        %v761 = vadd.f32 %v711, 1.0
        %v762 = vadd.f32 %v713, 1.0
        %v763 = vadd.f32 %v715, 1.0
        %v764 = vadd.f32 %v717, 1.0
        %v765 = vadd.f32 %v719, 1.0
        %v766 = vadd.f32 %v721, 1.0
        %v767 = vadd.f32 %v723, 1.0
        %v768 = vadd.f32 %v725, 1.0
        %v769 = vadd.f32 %v727, 1.0
        %v770 = vadd.f32 %v729, 1.0
        %v771 = vadd.f32 %v731, 1.0
        %v772 = vadd.f32 %v733, 1.0
        %v773 = vadd.f32 %v735, 1.0
        %v774 = vadd.f32 %v737, 1.0
        %v775 = vadd.f32 %v739, 1.0
        %v776 = vadd.f32 %v741, 1.0
        %v777 = vadd.f32 %v743, 1.0
        %v778 = vadd.f32 %v745, 1.0
        %v779 = vadd.f32 %v747, 1.0
        %v780 = vrcp.pop %v748
        %v781 = vmul.f32 1.0, %v780
        %v782 = vrcp.pop %v749
        %v783 = vmul.f32 1.0, %v782
        %v784 = vrcp.pop %v750
        %v785 = vmul.f32 1.0, %v784
        %v786 = vrcp.pop %v751
        %v787 = vmul.f32 1.0, %v786
        %v788 = vrcp.pop %v752
        %v789 = vmul.f32 1.0, %v788
        %v790 = vrcp.pop %v753
        %v791 = vmul.f32 1.0, %v790
        %v792 = vrcp.pop %v754
        %v793 = vmul.f32 1.0, %v792
        %v794 = vrcp.pop %v755
        %v795 = vmul.f32 1.0, %v794
        %v796 = vrcp.pop %v756
        %v797 = vmul.f32 1.0, %v796
        %v798 = vrcp.pop %v757
        %v799 = vmul.f32 1.0, %v798
        %v800 = vrcp.pop %v758
        %v801 = vmul.f32 1.0, %v800
        %v802 = vrcp.pop %v759
        %v803 = vmul.f32 1.0, %v802
        %v804 = vrcp.pop %v760
        %v805 = vmul.f32 1.0, %v804
        %v806 = vrcp.pop %v761
        %v807 = vmul.f32 1.0, %v806
        %v808 = vrcp.pop %v762
        %v809 = vmul.f32 1.0, %v808
        %v810 = vrcp.pop %v763
        %v811 = vmul.f32 1.0, %v810
        %v812 = vrcp.pop %v764
        %v813 = vmul.f32 1.0, %v812
        %v814 = vrcp.pop %v765
        %v815 = vmul.f32 1.0, %v814
        %v816 = vrcp.pop %v766
        %v817 = vmul.f32 1.0, %v816
        %v818 = vrcp.pop %v767
        %v819 = vmul.f32 1.0, %v818
        %v820 = vrcp.pop %v768
        %v821 = vmul.f32 1.0, %v820
        %v822 = vrcp.pop %v769
        %v823 = vmul.f32 1.0, %v822
        %v824 = vrcp.pop %v770
        %v825 = vmul.f32 1.0, %v824
        %v826 = vrcp.pop %v771
        %v827 = vmul.f32 1.0, %v826
        %v828 = vrcp.pop %v772
        %v829 = vmul.f32 1.0, %v828
        %v830 = vrcp.pop %v773
        %v831 = vmul.f32 1.0, %v830
        %v832 = vrcp.pop %v774
        %v833 = vmul.f32 1.0, %v832
        %v834 = vrcp.pop %v775
        %v835 = vmul.f32 1.0, %v834
        %v836 = vrcp.pop %v776
        %v837 = vmul.f32 1.0, %v836
        %v838 = vrcp.pop %v777
        %v839 = vmul.f32 1.0, %v838
        %v840 = vrcp.pop %v778
        %v841 = vmul.f32 1.0, %v840
        %v842 = vrcp.pop %v779
        %v843 = vmul.f32 1.0, %v842
        %v844 = vmul.f32 %v620, %v781
        %v845 = vmul.f32 %v621, %v783
        %v846 = vmul.f32 %v622, %v785
        %v847 = vmul.f32 %v623, %v787
        %v848 = vmul.f32 %v624, %v789
        %v849 = vmul.f32 %v625, %v791
        %v850 = vmul.f32 %v626, %v793
        %v851 = vmul.f32 %v627, %v795
        %v852 = vmul.f32 %v628, %v797
        %v853 = vmul.f32 %v629, %v799
        %v854 = vmul.f32 %v630, %v801
        %v855 = vmul.f32 %v631, %v803
        %v856 = vmul.f32 %v632, %v805
        %v857 = vmul.f32 %v633, %v807
        %v858 = vmul.f32 %v634, %v809
        %v859 = vmul.f32 %v635, %v811
        %v860 = vmul.f32 %v636, %v813
        %v861 = vmul.f32 %v637, %v815
        %v862 = vmul.f32 %v638, %v817
        %v863 = vmul.f32 %v639, %v819
        %v864 = vmul.f32 %v640, %v821
        %v865 = vmul.f32 %v641, %v823
        %v866 = vmul.f32 %v642, %v825
        %v867 = vmul.f32 %v643, %v827
        %v868 = vmul.f32 %v644, %v829
        %v869 = vmul.f32 %v645, %v831
        %v870 = vmul.f32 %v646, %v833
        %v871 = vmul.f32 %v647, %v835
        %v872 = vmul.f32 %v648, %v837
        %v873 = vmul.f32 %v649, %v839
        %v874 = vmul.f32 %v650, %v841
        %v875 = vmul.f32 %v651, %v843
        %876 = vst [vmem:[%s215] sm:$0xff] %v844
        %877 = vst [vmem:[%s215 + $0x8] sm:$0xff] %v845
        %878 = vst [vmem:[%s215 + $0x10] sm:$0xff] %v846
        %879 = vst [vmem:[%s215 + $0x18] sm:$0xff] %v847
        %880 = vst [vmem:[%s215 + $0x20] sm:$0xff] %v848
        %881 = vst [vmem:[%s215 + $0x28] sm:$0xff] %v849
        %882 = vst [vmem:[%s215 + $0x30] sm:$0xff] %v850
        %883 = vst [vmem:[%s215 + $0x38] sm:$0xff] %v851
        %884 = vst [vmem:[%s215 + $0x40] sm:$0xff] %v852
        %885 = vst [vmem:[%s215 + $0x48] sm:$0xff] %v853
        %886 = vst [vmem:[%s215 + $0x50] sm:$0xff] %v854
        %887 = vst [vmem:[%s215 + $0x58] sm:$0xff] %v855
        %888 = vst [vmem:[%s215 + $0x60] sm:$0xff] %v856
        %889 = vst [vmem:[%s215 + $0x68] sm:$0xff] %v857
        %890 = vst [vmem:[%s215 + $0x70] sm:$0xff] %v858
        %891 = vst [vmem:[%s215 + $0x78] sm:$0xff] %v859
        %892 = vst [vmem:[%s215 + $0x80] sm:$0xff] %v860
        %893 = vst [vmem:[%s215 + $0x88] sm:$0xff] %v861
        %894 = vst [vmem:[%s215 + $0x90] sm:$0xff] %v862
        %895 = vst [vmem:[%s215 + $0x98] sm:$0xff] %v863
        %896 = vst [vmem:[%s215 + $0xa0] sm:$0xff] %v864
        %897 = vst [vmem:[%s215 + $0xa8] sm:$0xff] %v865
        %898 = vst [vmem:[%s215 + $0xb0] sm:$0xff] %v866
        %899 = vst [vmem:[%s215 + $0xb8] sm:$0xff] %v867
        %900 = vst [vmem:[%s215 + $0xc0] sm:$0xff] %v868
        %901 = vst [vmem:[%s215 + $0xc8] sm:$0xff] %v869
        %902 = vst [vmem:[%s215 + $0xd0] sm:$0xff] %v870
        %903 = vst [vmem:[%s215 + $0xd8] sm:$0xff] %v871
        %904 = vst [vmem:[%s215 + $0xe0] sm:$0xff] %v872
        %905 = vst [vmem:[%s215 + $0xe8] sm:$0xff] %v873
        %906 = vst [vmem:[%s215 + $0xf0] sm:$0xff] %v874
        %907 = vst [vmem:[%s215 + $0xf8] sm:$0xff] %v875
        %s908 = sand.u32 %s131, 1
        %s909 = scalar_lea.sflag [#allocation3], %s908
        %s910 = sand.u32 %s131, 1
        %s911 = smul.addr %s910, 256
        %s912 = scalar_lea.vmem [#allocation2], %s911
        // Predicated region
        $region37: #{tpu_custom_call.1} parent=35 // pred_check
          %p913 = pneg %p141
        $region38: #{tpu_custom_call.1} parent=35 // pred_check_branch
          %915 = sbr.rel (%p913) target = $region40
        $region39: #{tpu_custom_call.1} parent=35 // pred_region
          %s916 = smul.u32 32, %s23
          %s918 = ssub.s32 4096, 4096
          %919 = vsyncadd %s909, %s918
          %s920 = smul.addr %s22, 32
          %s921 = sadd.s32 %s916, %s920
          %s922 = smul.addr %s921, 128
          %s923 = scalar_lea.hbm %s4, %s922
          %s924 = sshll.u32 %s912, 4
          %s925 = int_to_ptr.vmem [resolvable:$true] %s924
          %930 = dma.vmem_to_hbm [thread:$0]  %s925, 4096, %s923, %s909, 128, 128, 8
        $region40: #{tpu_custom_call.1} parent=35 // pred_fallthru
          _
      $region36: #{tpu_custom_call.1} parent=5 // pred_fallthru
        _
      %p931 = scmp.le.s32.totalorder 2, %s13
      // Predicated region
      $region41: #{tpu_custom_call.1} parent=5 // pred_check
        %p932 = pneg %p931
      $region42: #{tpu_custom_call.1} parent=5 // pred_check_branch
        %934 = sbr.rel (%p932) target = $region44
      $region43: #{tpu_custom_call.1} parent=5 // pred_region
        %s935 = ssub.s32 %s13, 2
        // Predicated region
        $region45: #{tpu_custom_call.1} parent=43 // pred_check
          %p936 = pneg %p147
        $region46: #{tpu_custom_call.1} parent=43 // pred_check_branch
          %938 = sbr.rel (%p936) target = $region48
        $region47: #{tpu_custom_call.1} parent=43 // pred_region
          %s939 = sand.u32 %s132, 1
          %s940 = scalar_lea.sflag [#allocation3], %s939
          %s941 = sand.u32 %s132, 1
          %s942 = smul.addr %s941, 256
          %s943 = scalar_lea.vmem [#allocation2], %s942
          %944 = dma.done %s940, 4096
        $region48: #{tpu_custom_call.1} parent=43 // pred_fallthru
          _
      $region44: #{tpu_custom_call.1} parent=5 // pred_fallthru
        _
    $region6: #{tpu_custom_call.1} parent=1 // loop_footer
      %s17 = sadd.s32 1, %s13
    $region7: #{tpu_custom_call.1} parent=1 // loop_footer_branch
      %12 = sbr.rel target = $region3
    $region8: #{tpu_custom_call.1} parent=1 // loop_exit
      _
    %945 = vsyncpa [#allocation3], 1
    %s946 = scalar_lea.sflag [#allocation3], 1
    %947 = vsyncpa %s946, 1

</llo_original>
